<compile_context>
chip_gen: v5e
topology: v5e:2x2
jax: 0.10.0
libtpu: 0.0.40
codegen_flags: <defaults>
</compile_context>

<pallas_src>
import jax
import jax.numpy as jnp
from jax.experimental import pallas as pl
from jax.experimental.pallas import tpu as pltpu


def sse_kernel(x_ref, w_ref, o_ref):
    # x_ref: (C, S, 128) spatial tile for one batch element (lane/sublane dense)
    # w_ref: (C,) f32 conv weight column, resident in SMEM
    # o_ref: (C, S, 128) output tile
    x = x_ref[...]                                   # native dtype
    c = x.shape[0]

    # 1x1 conv to one channel == weighted sum over C.
    # C scalar-times-vreg multiply-adds, accumulated in f32 (EUP/VALU only).
    q = w_ref[0] * x[0].astype(jnp.float32)          # (S, 128) f32
    for k in range(1, c):                            # unrolled at trace time
        q = q + w_ref[k] * x[k].astype(jnp.float32)

    gate = jax.nn.sigmoid(q)                         # (S, 128) f32, EUP slot

    # Broadcast-multiply over the channel axis in the input's native dtype.
    o_ref[...] = (x * gate[None].astype(x.dtype)).astype(o_ref.dtype)


def _round_up(x, m):
    return (x + m - 1) // m * m


def sse_forward(u_nchw, conv_weight, *, target_block_bytes=4 * 1024 * 1024):
    """u_nchw: (N, C, H, W); conv_weight: (1, C, 1, 1) as in nn.Conv2d(C,1,1,bias=False)."""
    n, c, h, w = u_nchw.shape
    hw = h * w
    itemsize = jnp.dtype(u_nchw.dtype).itemsize

    # Free reshape to (N, C, HW).
    x = u_nchw.reshape(n, c, hw)

    # Dense 4-D layout (N, C, S, 128). Only pad if HW is not a multiple of 128
    # (at most 127 extra elements per row); no pad at all in the common case.
    hw_pad = _round_up(hw, 128)
    if hw_pad != hw:
        x = jnp.pad(x, ((0, 0), (0, 0), (0, hw_pad - hw)))
    s_total = hw_pad // 128
    x4 = x.reshape(n, c, s_total, 128)

    # Conv weight as C f32 scalars (SMEM); f32 math regardless of input dtype.
    w_vec = conv_weight.reshape(c).astype(jnp.float32)

    # Sublane granularity for the second-to-last block dim (8 f32, 16 bf16, ...).
    sublane = max(8, 32 // itemsize)

    # Spatial rows per block so one block payload ~= target_block_bytes.
    s_cap = max(sublane,
                (target_block_bytes // (c * 128 * itemsize)) // sublane * sublane)
    s_blk = min(s_cap, (s_total // sublane) * sublane)
    if s_blk == 0:
        # Tiny spatial extent: one block equal to the full (legal) array dim.
        s_blk = s_total

    # Real VMEM footprint: double-buffered input + double-buffered output.
    block_bytes = c * s_blk * 128 * itemsize
    vmem_bytes = max(4 * block_bytes + (2 << 20), 16 << 20)

    grid = (n, pl.cdiv(s_total, s_blk))   # ragged last block masked by Pallas

    out = pl.pallas_call(
        sse_kernel,
        out_shape=jax.ShapeDtypeStruct((n, c, s_total, 128), u_nchw.dtype),
        grid=grid,
        in_specs=[
            pl.BlockSpec((pl.Squeezed(), c, s_blk, 128), lambda i, j: (i, 0, j, 0)),
            pl.BlockSpec(memory_space=pltpu.MemorySpace.SMEM),
        ],
        out_specs=pl.BlockSpec((pl.Squeezed(), c, s_blk, 128),
                               lambda i, j: (i, 0, j, 0)),
        compiler_params=pltpu.CompilerParams(
            dimension_semantics=("parallel", "parallel"),
            vmem_limit_bytes=vmem_bytes,
        ),
        cost_estimate=pl.CostEstimate(
            flops=3 * n * c * hw,
            transcendentals=n * hw,
            bytes_accessed=2 * n * c * hw * itemsize + c * 4,
        ),
    )(x4, w_vec)

    out = out.reshape(n, c, hw_pad)
    if hw_pad != hw:
        out = out[:, :, :hw]
    return out.reshape(n, c, h, w)


if __name__ == "__main__":
    key = jax.random.PRNGKey(0)
    k_x, k_w = jax.random.split(key)

    N, C, H, W = 2, 4, 16, 16
    x = jax.random.normal(k_x, (N, C, H, W), dtype=jnp.float32)

    # Deterministic Conv2d(C, 1, kernel_size=1, bias=False) weight, shape (1, C, 1, 1).
    bound = 1.0 / (C ** 0.5)
    conv_w = jax.random.uniform(k_w, (1, C, 1, 1), jnp.float32, -bound, bound)

    out = jax.block_until_ready(sse_forward(x, conv_w))

    # Pure-JAX reference of the same semantics.
    q_ref = jax.nn.sigmoid(jnp.einsum("nchw,c->nhw", x, conv_w.reshape(C)))[:, None]
    ref = x * q_ref
    assert out.shape == (N, C, H, W)
    assert jnp.allclose(out, ref, atol=1e-5, rtol=1e-5), "mismatch vs reference"

    print("KERNEL_OK")
</pallas_src>

<mosaic_0001>
module attributes {stable_mosaic.version = 11 : i64} {
  func.func @sse_kernel(%arg0: i32, %arg1: i32, %arg2: memref<1x4x2x128xf32, #tpu.memory_space<vmem>>, %arg3: memref<4xf32, #tpu.memory_space<smem>>, %arg4: memref<1x4x2x128xf32, #tpu.memory_space<vmem>>) attributes {dimension_semantics = [#tpu.dimension_semantics<parallel>, #tpu.dimension_semantics<parallel>], iteration_bounds = array<i64: 2, 1>, scalar_prefetch = 0 : i64, scratch_operands = 0 : i64, tpu.core_type = #tpu.core_type<tc>, window_params = [{transform_indices = @transform_0, window_bounds = array<i64: 1, 4, 2, 128>}, {transform_indices = @transform_1, window_bounds = array<i64: 4>}, {transform_indices = @transform_2, window_bounds = array<i64: 1, 4, 2, 128>}]} {
    %c0 = arith.constant 0 : index
    %c0_0 = arith.constant 0 : index
    %c0_1 = arith.constant 0 : index
    %c0_2 = arith.constant 0 : index
    %0 = vector.load %arg2[%c0, %c0_0, %c0_1, %c0_2] : memref<1x4x2x128xf32, #tpu.memory_space<vmem>>, vector<1x4x2x128xf32>
    %1 = vector.shape_cast %0 : vector<1x4x2x128xf32> to vector<4x2x128xf32>
    %c0_3 = arith.constant 0 : index
    %2 = memref.load %arg3[%c0_3] : memref<4xf32, #tpu.memory_space<smem>>
    %3 = vector.extract_strided_slice %1 {offsets = [0, 0, 0], sizes = [1, 2, 128], strides = [1, 1, 1]} : vector<4x2x128xf32> to vector<1x2x128xf32>
    %4 = vector.shape_cast %3 : vector<1x2x128xf32> to vector<2x128xf32>
    %5 = vector.broadcast %2 : f32 to vector<2x128xf32>
    %6 = arith.mulf %5, %4 : vector<2x128xf32>
    %c1 = arith.constant 1 : index
    %7 = memref.load %arg3[%c1] : memref<4xf32, #tpu.memory_space<smem>>
    %8 = vector.extract_strided_slice %1 {offsets = [1, 0, 0], sizes = [1, 2, 128], strides = [1, 1, 1]} : vector<4x2x128xf32> to vector<1x2x128xf32>
    %9 = vector.shape_cast %8 : vector<1x2x128xf32> to vector<2x128xf32>
    %10 = vector.broadcast %7 : f32 to vector<2x128xf32>
    %11 = arith.mulf %10, %9 : vector<2x128xf32>
    %12 = arith.addf %6, %11 : vector<2x128xf32>
    %c2 = arith.constant 2 : index
    %13 = memref.load %arg3[%c2] : memref<4xf32, #tpu.memory_space<smem>>
    %14 = vector.extract_strided_slice %1 {offsets = [2, 0, 0], sizes = [1, 2, 128], strides = [1, 1, 1]} : vector<4x2x128xf32> to vector<1x2x128xf32>
    %15 = vector.shape_cast %14 : vector<1x2x128xf32> to vector<2x128xf32>
    %16 = vector.broadcast %13 : f32 to vector<2x128xf32>
    %17 = arith.mulf %16, %15 : vector<2x128xf32>
    %18 = arith.addf %12, %17 : vector<2x128xf32>
    %c3 = arith.constant 3 : index
    %19 = memref.load %arg3[%c3] : memref<4xf32, #tpu.memory_space<smem>>
    %20 = vector.extract_strided_slice %1 {offsets = [3, 0, 0], sizes = [1, 2, 128], strides = [1, 1, 1]} : vector<4x2x128xf32> to vector<1x2x128xf32>
    %21 = vector.shape_cast %20 : vector<1x2x128xf32> to vector<2x128xf32>
    %22 = vector.broadcast %19 : f32 to vector<2x128xf32>
    %23 = arith.mulf %22, %21 : vector<2x128xf32>
    %24 = arith.addf %18, %23 : vector<2x128xf32>
    %25 = arith.negf %24 : vector<2x128xf32>
    %26 = math.exp %25 : vector<2x128xf32>
    %cst = arith.constant 1.000000e+00 : f32
    %27 = vector.broadcast %cst : f32 to vector<2x128xf32>
    %28 = arith.addf %27, %26 : vector<2x128xf32>
    %29 = arith.divf %27, %28 : vector<2x128xf32>
    %30 = vector.shape_cast %29 : vector<2x128xf32> to vector<1x2x128xf32>
    %31 = vector.broadcast %30 : vector<1x2x128xf32> to vector<4x2x128xf32>
    %32 = arith.mulf %1, %31 : vector<4x2x128xf32>
    %c0_4 = arith.constant 0 : index
    %c0_5 = arith.constant 0 : index
    %c0_6 = arith.constant 0 : index
    %c0_7 = arith.constant 0 : index
    %33 = vector.load %arg4[%c0_4, %c0_5, %c0_6, %c0_7] : memref<1x4x2x128xf32, #tpu.memory_space<vmem>>, vector<1x4x2x128xf32>
    %34 = vector.shape_cast %33 : vector<1x4x2x128xf32> to vector<4x2x128xf32>
    %35 = vector.shape_cast %32 : vector<4x2x128xf32> to vector<1x4x2x128xf32>
    tpu.vector_store %arg4[%c0_4, %c0_5, %c0_6, %c0_7], %35 {strides = array<i32>} : memref<1x4x2x128xf32, #tpu.memory_space<vmem>>, vector<1x4x2x128xf32>,
    return
  }
  func.func @transform_0(%arg0: i32, %arg1: i32) -> (i32, i32, i32, i32) {
    %c0_i32 = arith.constant 0 : i32
    %c0_i32_0 = arith.constant 0 : i32
    %c0_i32_1 = arith.constant 0 : i32
    return %arg0, %c0_i32, %arg1, %c0_i32_0 : i32, i32, i32, i32
  }
  func.func @transform_1(%arg0: i32, %arg1: i32) -> i32 {
    %c0_i32 = arith.constant 0 : i32
    %c0_i32_0 = arith.constant 0 : i32
    return %c0_i32 : i32
  }
  func.func @transform_2(%arg0: i32, %arg1: i32) -> (i32, i32, i32, i32) {
    %c0_i32 = arith.constant 0 : i32
    %c0_i32_0 = arith.constant 0 : i32
    %c0_i32_1 = arith.constant 0 : i32
    return %arg0, %c0_i32, %arg1, %c0_i32_0 : i32, i32, i32, i32
  }
}

</mosaic_0001>

<llo_original>
// kernel: tpu_custom_call.1
$region0: #{tpu_custom_call.1}
  #allocation0 [shape = 'u32[]', space=smem, size = 0x4, offset = 0x4, fixed_abs, tag = 'smem constant byte address 0x4 - core index']
  #allocation1 [shape = 'u32[72,128]{1,0:T(1,128)}', space=vmem, size = 0x9000, scoped, tag = 'internal scratch']
  %s0 = inlined_call_operand.hbm [shape: f32[2,4,2,128], index: 0, kind: input, shape index: {}]
  %s1 = inlined_call_operand.hbm [shape: f32[4], index: 1, kind: input, shape index: {}]
  %s2 = inlined_call_operand.hbm [shape: f32[2,4,2,128], index: 2, kind: output, shape index: {}]
  %s3 = sld [smem:[#allocation0]]
  $region49: #{tpu_custom_call.1} parent=0
    _
  %s5 = ssub.s32 1, %s3
  %s6 = scalar_select 0, %s5, %s3
  $region1: #{tpu_custom_call.1} parent=0
    #allocation2 [shape = 'u8[8192]{0}', space=vmem, size = 0x2000, scoped, tag = 'input window, operand 0']
    #allocation3 [shape = 's32[2]{0}', space=sflag, size = 0x8, scoped, tag = 'scoped memory for tpu_custom_call.1']
    #allocation4 [shape = 's32[2]{0}', space=sflag, size = 0x8, scoped, tag = 'scoped memory for tpu_custom_call.1']
    #allocation5 [shape = 's32[2]{0}', space=sflag, size = 0x8, scoped, tag = 'scoped memory for tpu_custom_call.1']
    #allocation6 [shape = 'u8[512]{0}', space=smem, size = 0x200, scoped, tag = 'input window, operand 1, single buffered']
    #allocation7 [shape = 'u8[8192]{0}', space=vmem, size = 0x2000, scoped, tag = 'output window, operand 0']
    %7 = vsyncpa [#allocation3], 0
    %s8 = scalar_lea.sflag [#allocation3], 1
    %9 = vsyncpa %s8, 0
    %10 = vsyncpa [#allocation5], 0
    %11 = vsyncpa [#allocation4], 0
    %s12 = scalar_lea.sflag [#allocation4], 1
    %13 = vsyncpa %s12, 0
    loop: start=0, step=1, limit=4
    $region2: #{tpu_custom_call.1} parent=1 // loop_pre_header
      _
    $region3: #{tpu_custom_call.1} parent=1 // loop_header
      %s15 = sphi 0, %s19
      %p16 = scmp.ge.s32.totalorder %s15, 4
      %s22 = sphi 0, %s34
      %s23 = sphi 0, %s30
      %s24 = sphi 0, %s22
      %s25 = sphi 0, %s23
      %s26 = sphi 0, %s24
      %s27 = sphi 0, %s25
      %s39 = sphi 0, %s41
      %s42 = sphi 0, %s39
      %s43 = sphi 0, %s42
      %s59 = sphi 0, %s43
      %s63 = sphi 0, %s63
      %s65 = sphi 0, %s63
      %s66 = sphi 0, %s65
      %s80 = sphi 0, %s66
      %s88 = sphi 0, %s90
      %s91 = sphi 0, %s88
      %s92 = sphi 0, %s91
      %s108 = sphi 0, %s92
    $region4: #{tpu_custom_call.1} parent=1 // loop_header_branch
      %18 = sbr.rel (%p16) target = $region8
    $region5: #{tpu_custom_call.1} parent=1 // loop_body
      %s20 = ssub.s32 %s15, 1
      %s21 = ssub.s32 %s15, 2
      %s28 = sadd.s32 1, %s23
      %p29 = scmp.ge.s32.totalorder %s28, 1
      %s30 = scalar_select %p29, 0, %s28
      %s31 = sadd.s32 1, %s22
      %s32 = scalar_select %p29, %s31, %s22
      %p33 = scmp.ge.s32.totalorder %s32, 2
      %s34 = scalar_select %p33, 0, %s32
      %s35 = ssub.s32 %s22, %s34
      %s36 = ssub.s32 %s23, %s30
      %s37 = sor.u32 %s35, %s36
      %p38 = scmp.eq.s32.totalorder %s37, 0
      %s40 = sadd.s32 %s39, 1
      %s41 = scalar_select %p38, %s39, %s40
      %p44 = pneg %p38
      %p45 = scmp.eq.s32.totalorder %s15, 1
      %p46 = por %p44, %p45
      %p47 = scmp.ne.s32.totalorder %s39, %s42
      %p48 = scmp.eq.s32.totalorder %s15, 0
      %p49 = por %p47, %p48
      %p50 = scmp.ne.s32.totalorder %s39, %s42
      %p51 = scmp.eq.s32.totalorder %s20, 1
      %p52 = por %p50, %p51
      %p53 = scmp.ne.s32.totalorder %s42, %s43
      %p54 = scmp.eq.s32.totalorder %s20, 0
      %p55 = por %p53, %p54
      %p56 = scmp.ne.s32.totalorder %s42, %s43
      %p57 = scmp.eq.s32.totalorder %s21, 1
      %p58 = por %p56, %p57
      %p60 = scmp.ne.s32.totalorder %s43, %s59
      %p61 = scmp.eq.s32.totalorder %s21, 0
      %p62 = por %p60, %p61
      %s64 = sadd.s32 %s63, 1
      %p67 = scmp.eq.s32.totalorder %s15, 1
      %p68 = scmp.ne.s32.totalorder %s63, %s65
      %p69 = scmp.eq.s32.totalorder %s15, 0
      %p70 = por %p68, %p69
      %p71 = scmp.ne.s32.totalorder %s63, %s65
      %p72 = scmp.eq.s32.totalorder %s20, 1
      %p73 = por %p71, %p72
      %p74 = scmp.ne.s32.totalorder %s65, %s66
      %p75 = scmp.eq.s32.totalorder %s20, 0
      %p76 = por %p74, %p75
      %p77 = scmp.ne.s32.totalorder %s65, %s66
      %p78 = scmp.eq.s32.totalorder %s21, 1
      %p79 = por %p77, %p78
      %p81 = scmp.ne.s32.totalorder %s66, %s80
      %p82 = scmp.eq.s32.totalorder %s21, 0
      %p83 = por %p81, %p82
      %s84 = ssub.s32 %s22, %s34
      %s85 = ssub.s32 %s23, %s30
      %s86 = sor.u32 %s84, %s85
      %p87 = scmp.eq.s32.totalorder %s86, 0
      %s89 = sadd.s32 %s88, 1
      %s90 = scalar_select %p87, %s88, %s89
      %p93 = pneg %p87
      %p94 = scmp.eq.s32.totalorder %s15, 1
      %p95 = por %p93, %p94
      %p96 = scmp.ne.s32.totalorder %s88, %s91
      %p97 = scmp.eq.s32.totalorder %s15, 0
      %p98 = por %p96, %p97
      %p99 = scmp.ne.s32.totalorder %s88, %s91
      %p100 = scmp.eq.s32.totalorder %s20, 1
      %p101 = por %p99, %p100
      %p102 = scmp.ne.s32.totalorder %s91, %s92
      %p103 = scmp.eq.s32.totalorder %s20, 0
      %p104 = por %p102, %p103
      %p105 = scmp.ne.s32.totalorder %s91, %s92
      %p106 = scmp.eq.s32.totalorder %s21, 1
      %p107 = por %p105, %p106
      %p109 = scmp.ne.s32.totalorder %s92, %s108
      %p110 = scmp.eq.s32.totalorder %s21, 0
      %p111 = por %p109, %p110
      %p112 = scmp.le.s32.totalorder 1, %s15
      %p113 = scmp.lt.s32.totalorder %s15, 3
      %p114 = pnand %p112, %p113
      %p115 = pneg %p114
      // Predicated region
      $region9: #{tpu_custom_call.1} parent=5 // pred_check
        _
      $region10: #{tpu_custom_call.1} parent=5 // pred_check_branch
        %117 = sbr.rel (%p114) target = $region12
      $region11: #{tpu_custom_call.1} parent=5 // pred_region
        %s118 = ssub.s32 %s15, 1
        // Predicated region
        $region13: #{tpu_custom_call.1} parent=11 // pred_check
          %p119 = pneg %p76
        $region14: #{tpu_custom_call.1} parent=11 // pred_check_branch
          %121 = sbr.rel (%p119) target = $region16
        $region15: #{tpu_custom_call.1} parent=11 // pred_region
          %123 = vsyncadd [#allocation5], 0
          %s125 = sshll.u32 %s1, 4
          %s126 = int_to_ptr.hbm [resolvable:$true] %s125
          %128 = dma.hbm_to_smem %s126, 16, [#allocation6], [#allocation5]
        $region16: #{tpu_custom_call.1} parent=11 // pred_fallthru
          _
      $region12: #{tpu_custom_call.1} parent=5 // pred_fallthru
        _
      %p129 = scmp.lt.s32.totalorder %s15, 2
      // Predicated region
      $region17: #{tpu_custom_call.1} parent=5 // pred_check
        %p130 = pneg %p129
      $region18: #{tpu_custom_call.1} parent=5 // pred_check_branch
        %132 = sbr.rel (%p130) target = $region20
      $region19: #{tpu_custom_call.1} parent=5 // pred_region
        // Predicated region
        $region21: #{tpu_custom_call.1} parent=19 // pred_check
          %p133 = pneg %p49
        $region22: #{tpu_custom_call.1} parent=19 // pred_check_branch
          %135 = sbr.rel (%p133) target = $region24
        $region23: #{tpu_custom_call.1} parent=19 // pred_region
          %s136 = sand.u32 %s39, 1
          %s137 = scalar_lea.sflag [#allocation3], %s136
          %s138 = sand.u32 %s39, 1
          %s139 = smul.addr %s138, 8
          %s140 = scalar_lea.vmem [#allocation2], %s139
          %142 = vsyncadd %s137, 0
          %s143 = smul.addr %s22, 4
          %s144 = sadd.s32 %s23, %s143
          %s145 = smul.addr %s144, 2
          %s146 = scalar_lea.hbm %s0, %s145
          %s147 = sshll.u32 %s146, 4
          %s148 = int_to_ptr.hbm [resolvable:$true] %s147
          %s149 = sshll.u32 %s140, 4
          %s150 = int_to_ptr.vmem [resolvable:$true] %s149
          %155 = dma.hbm_to_vmem [thread:$0]  %s148, 128, %s150, %s137, 32, 32, 2
        $region24: #{tpu_custom_call.1} parent=19 // pred_fallthru
          _
      $region20: #{tpu_custom_call.1} parent=5 // pred_fallthru
        _
      %p156 = scmp.le.s32.totalorder 1, %s15
      %p157 = scmp.lt.s32.totalorder %s15, 3
      %p158 = pnand %p156, %p157
      %p159 = pneg %p158
      // Predicated region
      $region25: #{tpu_custom_call.1} parent=5 // pred_check
        _
      $region26: #{tpu_custom_call.1} parent=5 // pred_check_branch
        %161 = sbr.rel (%p158) target = $region28
      $region27: #{tpu_custom_call.1} parent=5 // pred_region
        %s162 = ssub.s32 %s15, 1
        %s163 = sand.u32 %s42, 1
        %s164 = scalar_lea.sflag [#allocation3], %s163
        %s165 = sand.u32 %s42, 1
        %s166 = smul.addr %s165, 8
        %s167 = scalar_lea.vmem [#allocation2], %s166
        // Predicated region
        $region29: #{tpu_custom_call.1} parent=27 // pred_check
          %p168 = pneg %p55
        $region30: #{tpu_custom_call.1} parent=27 // pred_check_branch
          %170 = sbr.rel (%p168) target = $region32
        $region31: #{tpu_custom_call.1} parent=27 // pred_region
          %172 = dma.done %s164, 128
        $region32: #{tpu_custom_call.1} parent=27 // pred_fallthru
          _
        // Predicated region
        $region33: #{tpu_custom_call.1} parent=27 // pred_check
          %p173 = pneg %p76
        $region34: #{tpu_custom_call.1} parent=27 // pred_check_branch
          %175 = sbr.rel (%p173) target = $region36
        $region35: #{tpu_custom_call.1} parent=27 // pred_region
          %177 = dma.done [#allocation5], 16
        $region36: #{tpu_custom_call.1} parent=27 // pred_fallthru
          _
        %178 = sfence
        %s179 = sand.u32 %s42, 1
        %s180 = scalar_lea.sflag [#allocation3], %s179
        %s181 = sand.u32 %s42, 1
        %s182 = smul.addr %s181, 8
        %s183 = scalar_lea.vmem [#allocation2], %s182
        %p184 = pneg %p55
        %p185 = pneg %p52
        %p186 = pneg %p76
        %p187 = pneg %p73
        %p188 = pneg %p104
        %p189 = pneg %p101
        %s190 = sand.u32 %s91, 1
        %s191 = scalar_lea.sflag [#allocation4], %s190
        %s192 = sand.u32 %s91, 1
        %s193 = smul.addr %s192, 8
        %s194 = scalar_lea.vmem [#allocation7], %s193
        %v195 = vld [vmem:[%s167] sm:$0x3]
        %v196 = vld [vmem:[%s167 + $0x2] sm:$0x3]
        %v197 = vld [vmem:[%s167 + $0x4] sm:$0x3]
        %v198 = vld [vmem:[%s167 + $0x6] sm:$0x3]
        %s199 = sld [smem:[#allocation6]]
        %v200 = vstv %s199
        %v201 = vmul.f32 %v200, %v195
        %s202 = sld [smem:[#allocation6 + $0x1]]
        %v203 = vstv %s202
        %v204 = vmul.f32 %v203, %v196
        %v205 = vadd.f32 %v201, %v204
        %s206 = sld [smem:[#allocation6 + $0x2]]
        %v207 = vstv %s206
        %v208 = vmul.f32 %v207, %v197
        %v209 = vadd.f32 %v205, %v208
        %s210 = sld [smem:[#allocation6 + $0x3]]
        %v211 = vstv %s210
        %v212 = vmul.f32 %v211, %v198
        %v213 = vadd.f32 %v209, %v212
        %v214 = vxor.u32 %v213, 2147483648
        %v215 = vmul.f32 %v214, 1.442695
        %v216 = vpow.pop %v215
        %v217 = vadd.f32 %v216, 1.0
        %v218 = vrcp.pop %v217
        %v219 = vmul.f32 %v217, %v218
        %v220 = vsub.f32 1.0, %v219
        %v221 = vmul.f32 %v218, %v220
        %v222 = vadd.f32 %v218, %v221
        %vm223 = vweird.f32 %v217
        %vm224 = vweird.f32 %v218
        %vm225 = vmor %vm223, %vm224
        %v226 = vsel %vm225, %v218, %v222
        %v227 = vand.u32 2147483647, %v217
        %vm228 = vcmp.eq.f32.partialorder %v227, 8.507059e+37
        %v229 = vand.u32 %v217, 2147483648
        %v230 = vor.u32 1.1754944e-38, %v229
        %v231 = vsel %vm228, %v230, %v226
        %v232 = vmul.f32 1.0, %v231
        %v233 = vmul.f32 %v195, %v232
        %v234 = vmul.f32 %v196, %v232
        %v235 = vmul.f32 %v197, %v232
        %v236 = vmul.f32 %v198, %v232
        %237 = vst [vmem:[%s194] sm:$0x3] %v233
        %238 = vst [vmem:[%s194 + $0x2] sm:$0x3] %v234
        %239 = vst [vmem:[%s194 + $0x4] sm:$0x3] %v235
        %240 = vst [vmem:[%s194 + $0x6] sm:$0x3] %v236
        %s241 = sand.u32 %s91, 1
        %s242 = scalar_lea.sflag [#allocation4], %s241
        %s243 = sand.u32 %s91, 1
        %s244 = smul.addr %s243, 8
        %s245 = scalar_lea.vmem [#allocation7], %s244
        // Predicated region
        $region37: #{tpu_custom_call.1} parent=27 // pred_check
          %p246 = pneg %p101
        $region38: #{tpu_custom_call.1} parent=27 // pred_check_branch
          %248 = sbr.rel (%p246) target = $region40
        $region39: #{tpu_custom_call.1} parent=27 // pred_region
          %250 = vsyncadd %s242, 0
          %s251 = smul.addr %s24, 4
          %s252 = sadd.s32 %s25, %s251
          %s253 = smul.addr %s252, 2
          %s254 = scalar_lea.hbm %s2, %s253
          %s255 = sshll.u32 %s245, 4
          %s256 = int_to_ptr.vmem [resolvable:$true] %s255
          %s257 = sshll.u32 %s254, 4
          %s258 = int_to_ptr.hbm [resolvable:$true] %s257
          %263 = dma.vmem_to_hbm [thread:$0]  %s256, 128, %s258, %s242, 32, 32, 2
        $region40: #{tpu_custom_call.1} parent=27 // pred_fallthru
          _
      $region28: #{tpu_custom_call.1} parent=5 // pred_fallthru
        _
      %p264 = scmp.le.s32.totalorder 2, %s15
      // Predicated region
      $region41: #{tpu_custom_call.1} parent=5 // pred_check
        %p265 = pneg %p264
      $region42: #{tpu_custom_call.1} parent=5 // pred_check_branch
        %267 = sbr.rel (%p265) target = $region44
      $region43: #{tpu_custom_call.1} parent=5 // pred_region
        %s268 = ssub.s32 %s15, 2
        // Predicated region
        $region45: #{tpu_custom_call.1} parent=43 // pred_check
          %p269 = pneg %p107
        $region46: #{tpu_custom_call.1} parent=43 // pred_check_branch
          %271 = sbr.rel (%p269) target = $region48
        $region47: #{tpu_custom_call.1} parent=43 // pred_region
          %s272 = sand.u32 %s92, 1
          %s273 = scalar_lea.sflag [#allocation4], %s272
          %s274 = sand.u32 %s92, 1
          %s275 = smul.addr %s274, 8
          %s276 = scalar_lea.vmem [#allocation7], %s275
          %278 = dma.done %s273, 128
        $region48: #{tpu_custom_call.1} parent=43 // pred_fallthru
          _
      $region44: #{tpu_custom_call.1} parent=5 // pred_fallthru
        _
    $region6: #{tpu_custom_call.1} parent=1 // loop_footer
      %s19 = sadd.s32 1, %s15
    $region7: #{tpu_custom_call.1} parent=1 // loop_footer_branch
      %14 = sbr.rel target = $region3
    $region8: #{tpu_custom_call.1} parent=1 // loop_exit
      _
    %279 = vsyncpa [#allocation3], 1
    %s280 = scalar_lea.sflag [#allocation3], 1
    %281 = vsyncpa %s280, 1
    %282 = vsyncpa [#allocation4], 1
    %s283 = scalar_lea.sflag [#allocation4], 1
    %284 = vsyncpa %s283, 1
    %285 = vsyncpa [#allocation5], 1
    %s286 = scalar_lea.sflag [#allocation5], 1
    %287 = vsyncpa %s286, 1

</llo_original>
